<compile_context>
chip_gen: v6e
topology: v6e:2x2x1
jax: 0.10.0
libtpu: 0.0.40
codegen_flags: <defaults>
</compile_context>

<pallas_src>
import functools

import jax
import jax.numpy as jnp
from jax.experimental import pallas as pl
from jax.experimental.pallas import tpu as pltpu

EPS = 1e-6
GAMMA = 2.0            # module default; hardcoded as q*q below (gamma == 2)
IGNORE_INDEX = 255.0

LANES = 128
MAX_TILE_ROWS = 8192   # (8192, 128) f32 streaming block = 4 MiB per input buffer
SUB_ROWS = 512         # in-kernel slab; bounds body temporaries to ~0.25 MiB each
VMEM_LIMIT_BYTES = 40 << 20


def _cdiv(a, b):
    return (a + b - 1) // b


@functools.lru_cache(maxsize=1)
def _default_num_shards():
    """Best-effort TensorCore count (2 on v7x, 1 on v5e/v6e); falls back to 2."""
    try:
        info = pltpu.get_tpu_info()
        for name in ("num_cores", "core_count", "tensorcore_count",
                     "num_tensorcores", "num_tensor_cores"):
            v = getattr(info, name, None)
            if isinstance(v, int) and 1 <= v <= 8:
                return v
    except Exception:
        pass
    return 2


def _plain_contrib(o, t):
    """Plain-JAX (sum of (1-pt)^2*log(pt), valid count) for tiny remainders."""
    o = o.astype(jnp.float32)
    t = t.astype(jnp.float32)
    valid = t != IGNORE_INDEX
    o_c = jnp.clip(o, EPS, 1.0 - EPS)
    t_c = jnp.clip(t, EPS, 1.0 - EPS)
    pt = (1.0 - t_c) * (1.0 - o_c) + t_c * o_c
    contrib = (1.0 - pt) * (1.0 - pt) * jnp.log(pt)
    return (jnp.sum(jnp.where(valid, contrib, 0.0)),
            jnp.sum(valid.astype(jnp.float32)))


def _focal_loss_kernel(o_ref, t_ref, lsum_ref, csum_ref, *,
                       sub_rows, acc_rows, last_block, rows_in_last,
                       partial_last, has_redundant):
    c = pl.program_id(0)
    i = pl.program_id(1)

    @pl.when(i == 0)
    def _():
        lsum_ref[...] = jnp.zeros_like(lsum_ref)
        csum_ref[...] = jnp.zeros_like(csum_ref)

    tile_rows = o_ref.shape[0]
    n_sub_full = tile_rows // sub_rows
    block_idx = c * pl.num_programs(1) + i

    def accumulate(n_chunks, row_limit):
        # Stream the block in (sub_rows, 128) slabs so intermediates stay in a
        # handful of vregs / small VMEM temporaries.  row_limit (static) is the
        # number of real data rows for the partial last block; None == all real.
        @pl.loop(0, n_chunks)
        def _(j):
            r0 = pl.multiple_of(j * sub_rows, sub_rows)
            o = o_ref[pl.ds(r0, sub_rows), :].astype(jnp.float32)
            t = t_ref[pl.ds(r0, sub_rows), :].astype(jnp.float32)
            valid = (t != IGNORE_INDEX).astype(jnp.float32)
            o_c = jnp.clip(o, EPS, 1.0 - EPS)
            t_c = jnp.clip(t, EPS, 1.0 - EPS)
            pt = (1.0 - t_c) * (1.0 - o_c) + t_c * o_c
            q = 1.0 - pt
            # gamma == 2: q*q on the VPU (no pow); sign applied once in wrapper.
            contrib = (q * q) * jnp.log(pt)
            if row_limit is None:
                # Fast path: every row is real data; ignore-mask via multiply.
                contrib = contrib * valid
            else:
                # Partial last block: rows at/after row_limit are out-of-bounds
                # garbage; a select keeps NaN/Inf out of the accumulator.
                row_ids = jax.lax.broadcasted_iota(jnp.int32, (sub_rows, LANES), 0)
                in_range = (r0 + row_ids) < row_limit
                valid = jnp.where(in_range, valid, 0.0)
                contrib = jnp.where(in_range, contrib * valid, 0.0)
            lsum_ref[...] += contrib.reshape(-1, acc_rows, LANES).sum(axis=0)
            csum_ref[...] += valid.reshape(-1, acc_rows, LANES).sum(axis=0)

    if partial_last:
        n_sub_last = _cdiv(rows_in_last, sub_rows)

        @pl.when(block_idx < last_block)
        def _():
            accumulate(n_sub_full, None)

        @pl.when(block_idx == last_block)
        def _():
            accumulate(n_sub_last, rows_in_last)
        # block_idx > last_block: redundant clamped re-read; contributes nothing.
    elif has_redundant:
        @pl.when(block_idx <= last_block)
        def _():
            accumulate(n_sub_full, None)
    else:
        accumulate(n_sub_full, None)


@functools.partial(jax.jit, static_argnames=("max_tile_rows",))
def focal_loss_2d(outputs, targets, *, max_tile_rows=MAX_TILE_ROWS):
    o_flat = outputs.reshape(-1)
    t_flat = targets.reshape(-1)
    n = o_flat.shape[0]

    rows = n // LANES
    rem = n - rows * LANES

    if rows == 0:
        s, cnt = _plain_contrib(o_flat, t_flat)
        return -s / cnt

    tail_s = jnp.float32(0.0)
    tail_c = jnp.float32(0.0)
    if rem:
        # Ragged <128-element remainder handled with plain JAX; no full-array pad.
        # TODO(synk): the prefix slice below still costs one copy pass when
        # n % 128 != 0; a fully copy-free ragged path would need manual DMA
        # from a 1-D HBM ref.
        main_len = rows * LANES
        o_main = jax.lax.slice(o_flat, (0,), (main_len,))
        t_main = jax.lax.slice(t_flat, (0,), (main_len,))
        tail_s, tail_c = _plain_contrib(
            jax.lax.slice(o_flat, (main_len,), (n,)),
            jax.lax.slice(t_flat, (main_len,), (n,)))
    else:
        o_main, t_main = o_flat, t_flat

    o2 = o_main.reshape(rows, LANES)
    t2 = t_main.reshape(rows, LANES)

    # ---- tiling ----
    tile_rows = min(rows, max_tile_rows)
    if tile_rows > SUB_ROWS:
        # Round down to a multiple of SUB_ROWS so the in-kernel slab loop
        # divides evenly; the resulting partial last block is masked.
        tile_rows = (tile_rows // SUB_ROWS) * SUB_ROWS
        sub_rows = SUB_ROWS
    else:
        sub_rows = tile_rows
    if tile_rows < rows and tile_rows % 8 != 0:
        tile_rows = max(8, (tile_rows // 8) * 8)
        sub_rows = tile_rows
    acc_rows = 8 if sub_rows % 8 == 0 else sub_rows

    total_blocks = _cdiv(rows, tile_rows)
    n_shards = max(1, min(_default_num_shards(), total_blocks))
    steps = _cdiv(total_blocks, n_shards)
    last_block = total_blocks - 1
    partial_last = (rows % tile_rows) != 0
    rows_in_last = rows - last_block * tile_rows
    has_redundant = (n_shards * steps) != total_blocks

    kernel = functools.partial(
        _focal_loss_kernel,
        sub_rows=sub_rows, acc_rows=acc_rows, last_block=last_block,
        rows_in_last=rows_in_last, partial_last=partial_last,
        has_redundant=has_redundant)

    def in_map(c, i):
        # Clamp so a redundant trailing step (uneven shard split) re-reads the
        # last valid block; its contribution is skipped inside the kernel.
        return (jnp.minimum(c * steps + i, last_block), 0)

    in_bytes = (rows * LANES) * (jnp.dtype(o2.dtype).itemsize
                                 + jnp.dtype(t2.dtype).itemsize)
    cost = pl.CostEstimate(flops=15 * rows * LANES,
                           transcendentals=rows * LANES,
                           bytes_accessed=in_bytes)

    lsum, csum = pl.pallas_call(
        kernel,
        out_shape=(
            jax.ShapeDtypeStruct((n_shards * acc_rows, LANES), jnp.float32),
            jax.ShapeDtypeStruct((n_shards * acc_rows, LANES), jnp.float32),
        ),
        grid_spec=pltpu.PrefetchScalarGridSpec(
            num_scalar_prefetch=0,
            grid=(n_shards, steps),
            in_specs=[
                pl.BlockSpec((tile_rows, LANES), in_map),
                pl.BlockSpec((tile_rows, LANES), in_map),
            ],
            out_specs=(
                pl.BlockSpec((acc_rows, LANES), lambda c, i: (c, 0)),
                pl.BlockSpec((acc_rows, LANES), lambda c, i: (c, 0)),
            ),
        ),
        compiler_params=pltpu.CompilerParams(
            dimension_semantics=("parallel", "arbitrary"),
            vmem_limit_bytes=VMEM_LIMIT_BYTES),
        cost_estimate=cost,
    )(o2, t2)

    total_sum = jnp.sum(lsum) + tail_s
    total_cnt = jnp.sum(csum) + tail_c
    # All-ignored input -> 0/0 = NaN, matching torch .mean() over an empty
    # selection.  Per-lane f32 partial sums are fine up to ~1e7 elems/lane.
    return -total_sum / total_cnt


def focal_loss_2d_ref(outputs, targets):
    # Pure-JAX reference mirroring the PyTorch forward.
    t = targets.reshape(-1).astype(jnp.float32)
    o = outputs.reshape(-1).astype(jnp.float32)
    mask = t != IGNORE_INDEX
    o_c = jnp.clip(o, EPS, 1.0 - EPS)
    t_c = jnp.clip(t, EPS, 1.0 - EPS)
    pt = (1.0 - t_c) * (1.0 - o_c) + t_c * o_c
    loss = -((1.0 - pt) ** GAMMA) * jnp.log(pt)
    return jnp.sum(jnp.where(mask, loss, 0.0)) / jnp.sum(mask.astype(jnp.float32))


if __name__ == "__main__":
    key = jax.random.PRNGKey(0)
    k1, k2, k3 = jax.random.split(key, 3)

    # Small shape consistent with the module: probabilities + {0,1,255} targets.
    B, C, H, W = 2, 4, 16, 16
    outputs = jax.nn.sigmoid(jax.random.normal(k1, (B, C, H, W), jnp.float32))
    targets = jax.random.bernoulli(k2, 0.5, (B, C, H, W)).astype(jnp.float32)
    ignore = jax.random.bernoulli(k3, 0.1, (B, C, H, W))
    targets = jnp.where(ignore, IGNORE_INDEX, targets)

    loss = jax.block_until_ready(focal_loss_2d(outputs, targets))
    ref = focal_loss_2d_ref(outputs, targets)
    assert jnp.allclose(loss, ref, rtol=1e-5, atol=1e-6), (loss, ref)

    # Second check: ragged tail (n % 128 != 0) plus multi-block / sharded path
    # with a partial last block and a redundant clamped step (small tile).
    k4, k5, k6 = jax.random.split(jax.random.PRNGKey(1), 3)
    shape2 = (1, 3, 37, 53)   # n = 5883 -> 45 full rows + 123-element remainder
    outputs2 = jax.nn.sigmoid(jax.random.normal(k4, shape2, jnp.float32))
    targets2 = jax.random.bernoulli(k5, 0.5, shape2).astype(jnp.float32)
    targets2 = jnp.where(jax.random.bernoulli(k6, 0.15, shape2),
                         IGNORE_INDEX, targets2)
    loss2 = jax.block_until_ready(
        focal_loss_2d(outputs2, targets2, max_tile_rows=16))
    ref2 = focal_loss_2d_ref(outputs2, targets2)
    assert jnp.allclose(loss2, ref2, rtol=1e-5, atol=1e-6), (loss2, ref2)

    print("KERNEL_OK")
</pallas_src>

<mosaic_0001>
module attributes {stable_mosaic.version = 11 : i64} {
  func.func @_focal_loss_kernel(%arg0: i32, %arg1: i32, %arg2: memref<16x128xf32, #tpu.memory_space<vmem>>, %arg3: memref<16x128xf32, #tpu.memory_space<vmem>>, %arg4: memref<8x128xf32, #tpu.memory_space<vmem>>, %arg5: memref<8x128xf32, #tpu.memory_space<vmem>>) attributes {dimension_semantics = [#tpu.dimension_semantics<parallel>, #tpu.dimension_semantics<arbitrary>], iteration_bounds = array<i64: 1, 1>, scalar_prefetch = 0 : i64, scratch_operands = 0 : i64, tpu.core_type = #tpu.core_type<tc>, window_params = [{transform_indices = @transform_0, window_bounds = array<i64: 16, 128>}, {transform_indices = @transform_1, window_bounds = array<i64: 16, 128>}, {transform_indices = @transform_2, window_bounds = array<i64: 8, 128>}, {transform_indices = @transform_3, window_bounds = array<i64: 8, 128>}]} {
    %c0_i32 = arith.constant 0 : i32
    %0 = arith.cmpi eq, %arg1, %c0_i32 : i32
    %1 = arith.extui %0 : i1 to i32
    %c0_i32_0 = arith.constant 0 : i32
    %2 = arith.cmpi ne, %1, %c0_i32_0 : i32
    scf.if %2 {
      %cst_22 = arith.constant 0.000000e+00 : f32
      %46 = vector.broadcast %cst_22 : f32 to vector<8x128xf32>
      %c0_23 = arith.constant 0 : index
      %c0_24 = arith.constant 0 : index
      %47 = vector.load %arg4[%c0_23, %c0_24] : memref<8x128xf32, #tpu.memory_space<vmem>>, vector<8x128xf32>
      tpu.vector_store %arg4[%c0_23, %c0_24], %46 {strides = array<i32>} : memref<8x128xf32, #tpu.memory_space<vmem>>, vector<8x128xf32>,
      %cst_25 = arith.constant 0.000000e+00 : f32
      %48 = vector.broadcast %cst_25 : f32 to vector<8x128xf32>
      %c0_26 = arith.constant 0 : index
      %c0_27 = arith.constant 0 : index
      %49 = vector.load %arg5[%c0_26, %c0_27] : memref<8x128xf32, #tpu.memory_space<vmem>>, vector<8x128xf32>
      tpu.vector_store %arg5[%c0_26, %c0_27], %48 {strides = array<i32>} : memref<8x128xf32, #tpu.memory_space<vmem>>, vector<8x128xf32>,
    } else {
    }
    %c0_i32_1 = arith.constant 0 : i32
    %c1_i32 = arith.constant 1 : i32
    %3 = arith.muli %c0_i32_1, %c1_i32 : i32
    %c0_i32_2 = arith.constant 0 : i32
    %4 = arith.addi %c0_i32_2, %3 : i32
    %c16_i32 = arith.constant 16 : i32
    %5 = arith.muli %4, %c16_i32 : i32
    %6 = tpu.assume_multiple %5, 16 : i32
    %7 = arith.index_cast %6 : i32 to index
    %c0 = arith.constant 0 : index
    %8 = vector.load %arg2[%7, %c0] : memref<16x128xf32, #tpu.memory_space<vmem>>, vector<16x128xf32>
    %9 = arith.index_cast %6 : i32 to index
    %c0_3 = arith.constant 0 : index
    %10 = vector.load %arg3[%9, %c0_3] : memref<16x128xf32, #tpu.memory_space<vmem>>, vector<16x128xf32>
    %cst = arith.constant 2.550000e+02 : f32
    %11 = vector.broadcast %cst : f32 to vector<16x128xf32>
    %12 = arith.cmpf one, %10, %11 : vector<16x128xf32>
    %13 = arith.extui %12 : vector<16x128xi1> to vector<16x128xi32>
    %14 = arith.sitofp %13 : vector<16x128xi32> to vector<16x128xf32>
    %cst_4 = arith.constant 9.99999997E-7 : f32
    %cst_5 = arith.constant 0.999998986 : f32
    %15 = vector.broadcast %cst_4 : f32 to vector<16x128xf32>
    %16 = arith.maximumf %15, %8 : vector<16x128xf32>
    %17 = vector.broadcast %cst_5 : f32 to vector<16x128xf32>
    %18 = arith.minimumf %17, %16 : vector<16x128xf32>
    %cst_6 = arith.constant 9.99999997E-7 : f32
    %cst_7 = arith.constant 0.999998986 : f32
    %19 = vector.broadcast %cst_6 : f32 to vector<16x128xf32>
    %20 = arith.maximumf %19, %10 : vector<16x128xf32>
    %21 = vector.broadcast %cst_7 : f32 to vector<16x128xf32>
    %22 = arith.minimumf %21, %20 : vector<16x128xf32>
    %cst_8 = arith.constant 1.000000e+00 : f32
    %23 = vector.broadcast %cst_8 : f32 to vector<16x128xf32>
    %24 = arith.subf %23, %22 : vector<16x128xf32>
    %cst_9 = arith.constant 1.000000e+00 : f32
    %25 = vector.broadcast %cst_9 : f32 to vector<16x128xf32>
    %26 = arith.subf %25, %18 : vector<16x128xf32>
    %27 = arith.mulf %24, %26 : vector<16x128xf32>
    %28 = arith.mulf %22, %18 : vector<16x128xf32>
    %29 = arith.addf %27, %28 : vector<16x128xf32>
    %cst_10 = arith.constant 1.000000e+00 : f32
    %30 = vector.broadcast %cst_10 : f32 to vector<16x128xf32>
    %31 = arith.subf %30, %29 : vector<16x128xf32>
    %32 = arith.mulf %31, %31 : vector<16x128xf32>
    %33 = math.log %29 : vector<16x128xf32>
    %34 = arith.mulf %32, %33 : vector<16x128xf32>
    %35 = arith.mulf %34, %14 : vector<16x128xf32>
    %c0_11 = arith.constant 0 : index
    %c0_12 = arith.constant 0 : index
    %36 = vector.load %arg4[%c0_11, %c0_12] : memref<8x128xf32, #tpu.memory_space<vmem>>, vector<8x128xf32>
    %37 = vector.shape_cast %35 : vector<16x128xf32> to vector<2x8x128xf32>
    %cst_13 = arith.constant dense<0.000000e+00> : vector<8x128xf32>
    %38 = vector.multi_reduction <add>, %37, %cst_13 [0] : vector<2x8x128xf32> to vector<8x128xf32>
    %39 = arith.addf %36, %38 : vector<8x128xf32>
    %c0_14 = arith.constant 0 : index
    %c0_15 = arith.constant 0 : index
    %40 = vector.load %arg4[%c0_14, %c0_15] : memref<8x128xf32, #tpu.memory_space<vmem>>, vector<8x128xf32>
    tpu.vector_store %arg4[%c0_14, %c0_15], %39 {strides = array<i32>} : memref<8x128xf32, #tpu.memory_space<vmem>>, vector<8x128xf32>,
    %c0_16 = arith.constant 0 : index
    %c0_17 = arith.constant 0 : index
    %41 = vector.load %arg5[%c0_16, %c0_17] : memref<8x128xf32, #tpu.memory_space<vmem>>, vector<8x128xf32>
    %42 = vector.shape_cast %14 : vector<16x128xf32> to vector<2x8x128xf32>
    %cst_18 = arith.constant dense<0.000000e+00> : vector<8x128xf32>
    %43 = vector.multi_reduction <add>, %42, %cst_18 [0] : vector<2x8x128xf32> to vector<8x128xf32>
    %44 = arith.addf %41, %43 : vector<8x128xf32>
    %c0_19 = arith.constant 0 : index
    %c0_20 = arith.constant 0 : index
    %45 = vector.load %arg5[%c0_19, %c0_20] : memref<8x128xf32, #tpu.memory_space<vmem>>, vector<8x128xf32>
    tpu.vector_store %arg5[%c0_19, %c0_20], %44 {strides = array<i32>} : memref<8x128xf32, #tpu.memory_space<vmem>>, vector<8x128xf32>,
    %c1_i32_21 = arith.constant 1 : i32
    return
  }
  func.func @transform_0(%arg0: i32, %arg1: i32) -> (i32, i32) {
    %c1_i32 = arith.constant 1 : i32
    %0 = arith.muli %arg0, %c1_i32 : i32
    %1 = arith.addi %0, %arg1 : i32
    %c0_i32 = arith.constant 0 : i32
    %2 = arith.minsi %1, %c0_i32 : i32
    %c0_i32_0 = arith.constant 0 : i32
    %c0_i32_1 = arith.constant 0 : i32
    return %2, %c0_i32_0 : i32, i32
  }
  func.func @transform_1(%arg0: i32, %arg1: i32) -> (i32, i32) {
    %c1_i32 = arith.constant 1 : i32
    %0 = arith.muli %arg0, %c1_i32 : i32
    %1 = arith.addi %0, %arg1 : i32
    %c0_i32 = arith.constant 0 : i32
    %2 = arith.minsi %1, %c0_i32 : i32
    %c0_i32_0 = arith.constant 0 : i32
    %c0_i32_1 = arith.constant 0 : i32
    return %2, %c0_i32_0 : i32, i32
  }
  func.func @transform_2(%arg0: i32, %arg1: i32) -> (i32, i32) {
    %c0_i32 = arith.constant 0 : i32
    %c0_i32_0 = arith.constant 0 : i32
    return %arg0, %c0_i32 : i32, i32
  }
  func.func @transform_3(%arg0: i32, %arg1: i32) -> (i32, i32) {
    %c0_i32 = arith.constant 0 : i32
    %c0_i32_0 = arith.constant 0 : i32
    return %arg0, %c0_i32 : i32, i32
  }
}

</mosaic_0001>

<llo_original>
// kernel: focal_loss_2d.1
$region0: #{focal_loss_2d.1}
  #allocation0 [shape = 'u32[]', space=smem, size = 0x4, offset = 0x4, fixed_abs, tag = 'smem constant byte address 0x4 - core index']
  #allocation1 [shape = 'u32[144,128]{1,0:T(1,128)}', space=vmem, size = 0x12000, scoped, tag = 'internal scratch']
  %s0 = inlined_call_operand.vmem [shape: f32[16,128], index: 0, kind: input, shape index: {}]
  %s1 = inlined_call_operand.vmem [shape: f32[16,128], index: 1, kind: input, shape index: {}]
  %s2 = inlined_call_operand.vmem [shape: f32[8,128], index: 2, kind: output, shape index: {0}]
  %s3 = inlined_call_operand.vmem [shape: f32[8,128], index: 3, kind: output, shape index: {1}]
  %4 = xla_tuple %s2, %s3
  %s5 = sld [smem:[#allocation0]]
  $region30: #{focal_loss_2d.1} parent=0
    _
  %s7 = ssub.s32 1, %s5
  %s8 = scalar_select 0, %s7, %s5
  // Predicated region
  $region2: #{focal_loss_2d.1} parent=0 // pred_check
    _
  $region3: #{focal_loss_2d.1} parent=0 // pred_check_branch
    %10 = sbr.rel (0) target = $region5
  $region4: #{focal_loss_2d.1} parent=0 // pred_region
    %s11 = sadd.s32 0, 0
    %p12 = scmp.lt.s32.totalorder %s11, 0
    %s13 = scalar_select %p12, %s11, 0
    %s14 = smul.u32 2, %s13
    %p15 = scmp.lt.s32.totalorder %s14, 1
    %s16 = scalar_select %p15, %s14, 1
    %s17 = smul.addr %s16, 8
    %s18 = scalar_lea.vmem %s0, %s17
    %s19 = sadd.s32 0, 0
    %p20 = scmp.lt.s32.totalorder %s19, 0
    %s21 = scalar_select %p20, %s19, 0
    %s22 = smul.u32 2, %s21
  $region5: #{focal_loss_2d.1} parent=0 // pred_fallthru
    _
  // Predicated region
  $region6: #{focal_loss_2d.1} parent=0 // pred_check
    _
  $region7: #{focal_loss_2d.1} parent=0 // pred_check_branch
    %24 = sbr.rel (0) target = $region9
  $region8: #{focal_loss_2d.1} parent=0 // pred_region
    %s25 = sadd.s32 0, 0
    %p26 = scmp.lt.s32.totalorder %s25, 0
    %s27 = scalar_select %p26, %s25, 0
    %s28 = smul.u32 2, %s27
    %p29 = scmp.lt.s32.totalorder %s28, 1
    %s30 = scalar_select %p29, %s28, 1
    %s31 = smul.addr %s30, 8
    %s32 = scalar_lea.vmem %s1, %s31
    %s33 = sadd.s32 0, 0
    %p34 = scmp.lt.s32.totalorder %s33, 0
    %s35 = scalar_select %p34, %s33, 0
    %s36 = smul.u32 2, %s35
  $region9: #{focal_loss_2d.1} parent=0 // pred_fallthru
    _
  %s37 = sadd.s32 0, 0
  %p38 = scmp.lt.s32.totalorder %s37, 0
  %s39 = scalar_select %p38, %s37, 0
  %s40 = smul.u32 2, %s39
  %p41 = scmp.lt.s32.totalorder %s40, 1
  %s42 = scalar_select %p41, %s40, 1
  %s43 = smul.addr %s42, 8
  %s44 = scalar_lea.vmem %s0, %s43
  %s45 = sadd.s32 0, 0
  %p46 = scmp.lt.s32.totalorder %s45, 0
  %s47 = scalar_select %p46, %s45, 0
  %s48 = smul.u32 2, %s47
  %p49 = scmp.lt.s32.totalorder %s48, 1
  %s50 = scalar_select %p49, %s48, 1
  %s51 = smul.addr %s50, 8
  %s52 = scalar_lea.vmem %s1, %s51
  %s53 = sadd.s32 0, 0
  %p54 = scmp.lt.s32.totalorder %s53, 0
  %s55 = scalar_select %p54, %s53, 0
  %s56 = smul.u32 2, %s55
  %p57 = scmp.lt.s32.totalorder %s56, 1
  %s58 = scalar_select %p57, %s56, 1
  %s59 = smul.addr %s58, 8
  %s60 = scalar_lea.vmem %s0, %s59
  %s61 = sadd.s32 0, 0
  %p62 = scmp.lt.s32.totalorder %s61, 0
  %s63 = scalar_select %p62, %s61, 0
  %s64 = smul.u32 2, %s63
  %s65 = sadd.s32 0, 0
  %p66 = scmp.lt.s32.totalorder %s65, 0
  %s67 = scalar_select %p66, %s65, 0
  %s68 = smul.u32 2, %s67
  %p69 = scmp.lt.s32.totalorder %s68, 1
  %s70 = scalar_select %p69, %s68, 1
  %s71 = smul.addr %s70, 8
  %s72 = scalar_lea.vmem %s1, %s71
  %s73 = sadd.s32 0, 0
  %p74 = scmp.lt.s32.totalorder %s73, 0
  %s75 = scalar_select %p74, %s73, 0
  %s76 = smul.u32 2, %s75
  %p77 = scmp.eq.s32.totalorder 0, 0
  // Predicated region
  $region10: #{focal_loss_2d.1} parent=0 // pred_check
    %p78 = pneg %p77
  $region11: #{focal_loss_2d.1} parent=0 // pred_check_branch
    %80 = sbr.rel (%p78) target = $region13
  $region12: #{focal_loss_2d.1} parent=0 // pred_region
    %81 = vst [vmem:[%s2] sm:$0xff] 0.0
    %82 = vst [vmem:[%s3] sm:$0xff] 0.0
  $region13: #{focal_loss_2d.1} parent=0 // pred_fallthru
    _
  %v83 = vld [vmem:[%s60] sm:$0xff]
  %v84 = vld [vmem:[%s60 + $0x8] sm:$0xff]
  %v85 = vld [vmem:[%s72] sm:$0xff]
  %v86 = vld [vmem:[%s72 + $0x8] sm:$0xff]
  %vm87 = vcmp.ne.f32.partialorder %v85, 255.0
  %vm88 = vcmp.ne.f32.partialorder %v86, 255.0
  %v89 = vsel %vm87, 1, 0
  %v90 = vsel %vm88, 1, 0
  %v91 = vcvt.s32.f32 %v89
  %v92 = vcvt.s32.f32 %v90
  %v93 = vmax.f32 %v83, 1e-06
  %v94 = vmax.f32 %v84, 1e-06
  %v95 = vmin.f32 %v93, 0.999999
  %v96 = vmin.f32 %v94, 0.999999
  %v97 = vmax.f32 %v85, 1e-06
  %v98 = vmax.f32 %v86, 1e-06
  %v99 = vmin.f32 %v97, 0.999999
  %v100 = vmin.f32 %v98, 0.999999
  %v101 = vsub.f32 1.0, %v99
  %v102 = vsub.f32 1.0, %v100
  %v103 = vsub.f32 1.0, %v95
  %v104 = vsub.f32 1.0, %v96
  %v105 = vmul.f32 %v101, %v103
  %v106 = vmul.f32 %v102, %v104
  %v107 = vmul.f32 %v99, %v95
  %v108 = vmul.f32 %v100, %v96
  %v109 = vadd.f32 %v105, %v107
  %v110 = vadd.f32 %v106, %v108
  %v111 = vsub.f32 1.0, %v109
  %v112 = vsub.f32 1.0, %v110
  %v113 = vmul.f32 %v111, %v111
  %v114 = vmul.f32 %v112, %v112
  %v115 = vlog2.pop %v109
  %v116 = vmul.f32 %v115, 0.6931472
  %v117 = vlog2.pop %v110
  %v118 = vmul.f32 %v117, 0.6931472
  %v119 = vmul.f32 %v113, %v116
  %v120 = vmul.f32 %v114, %v118
  %v121 = vmul.f32 %v119, %v91
  %v122 = vmul.f32 %v120, %v92
  %v123 = vld [vmem:[%s2] sm:$0xff]
  %v124 = vadd.f32 %v121, %v122
  %v125 = vadd.f32 %v123, %v124
  %126 = vst [vmem:[%s2] sm:$0xff] %v125
  %v127 = vld [vmem:[%s3] sm:$0xff]
  %v128 = vadd.f32 %v91, %v92
  %v129 = vadd.f32 %v127, %v128
  %130 = vst [vmem:[%s3] sm:$0xff] %v129
  // Predicated region
  $region14: #{focal_loss_2d.1} parent=0 // pred_check
    _
  $region15: #{focal_loss_2d.1} parent=0 // pred_check_branch
    %132 = sbr.rel (0) target = $region17
  $region16: #{focal_loss_2d.1} parent=0 // pred_region
    _
  $region17: #{focal_loss_2d.1} parent=0 // pred_fallthru
    _
  // Predicated region
  $region18: #{focal_loss_2d.1} parent=0 // pred_check
    _
  $region19: #{focal_loss_2d.1} parent=0 // pred_check_branch
    %134 = sbr.rel (0) target = $region21
  $region20: #{focal_loss_2d.1} parent=0 // pred_region
    _
  $region21: #{focal_loss_2d.1} parent=0 // pred_fallthru
    _
  // Predicated region
  $region22: #{focal_loss_2d.1} parent=0 // pred_check
    _
  $region23: #{focal_loss_2d.1} parent=0 // pred_check_branch
    %136 = sbr.rel (0) target = $region25
  $region24: #{focal_loss_2d.1} parent=0 // pred_region
    _
  $region25: #{focal_loss_2d.1} parent=0 // pred_fallthru
    _
  // Predicated region
  $region26: #{focal_loss_2d.1} parent=0 // pred_check
    _
  $region27: #{focal_loss_2d.1} parent=0 // pred_check_branch
    %138 = sbr.rel (0) target = $region29
  $region28: #{focal_loss_2d.1} parent=0 // pred_region
    _
  $region29: #{focal_loss_2d.1} parent=0 // pred_fallthru
    _

</llo_original>
